<compile_context>
chip_gen: v6e
topology: v6e:2x2x1
jax: 0.10.0
libtpu: 0.0.40
codegen_flags: <defaults>
</compile_context>

<pallas_src>
import functools
import math

import jax
import jax.numpy as jnp
from jax import lax
from jax.experimental import pallas as pl
from jax.experimental.pallas import tpu as pltpu


def _peg_kernel(x_ref, w_ref, b_ref, o_ref, *, d, h):
    # x_ref : (bt*h, W*d)  batch tile fused on sublanes, (w, d) fused on lanes
    # w_ref : (9, W*d)     per-tap weight vectors, k = 3*ki + kj (wrap lanes zeroed)
    # b_ref : (1, W*d)     bias tiled along w
    # o_ref : (bt*h, W*d)
    BH, WD = x_ref.shape
    x = x_ref[...].astype(jnp.float32)          # f32 accumulation path

    # Column-neighbour views via two lane rolls (XLU).  Their wrap-around
    # lanes are neutralised by pre-zeroed weight lanes (done in the wrapper).
    xl = pltpu.roll(x, shift=d, axis=1)         # x[:, j-1, :]
    xr = pltpu.roll(x, shift=WD - d, axis=1)    # x[:, j+1, :]

    # Separable stencil: horizontal combinations, one per kernel row.
    row_top = x * w_ref[1] + xl * w_ref[0] + xr * w_ref[2]
    row_mid = x * w_ref[4] + xl * w_ref[3] + xr * w_ref[5] + b_ref[...]
    row_bot = x * w_ref[7] + xl * w_ref[6] + xr * w_ref[8]

    # Vertical shifts via +-1 sublane rolls; rows that would wrap across an
    # image boundary inside the fused (bt*h) sublane axis are masked out.
    row = lax.broadcasted_iota(jnp.int32, (BH, WD), 0)
    if BH == h:                       # single image per block
        rmod = row
    elif (h & (h - 1)) == 0:          # h power of two -> cheap bitwise AND
        rmod = row & (h - 1)
    else:
        rmod = row % h
    has_above = rmod >= 1
    has_below = rmod <= h - 2

    acc = row_mid
    acc = acc + jnp.where(has_above, pltpu.roll(row_top, shift=1, axis=0), 0.0)
    acc = acc + jnp.where(has_below, pltpu.roll(row_bot, shift=BH - 1, axis=0), 0.0)

    o_ref[...] = acc.astype(o_ref.dtype)


def peg_forward(x, weight_dw, bias):
    """PEG forward. x: (b, n, d); weight_dw: (d, 3, 3); bias: (d,)."""
    b, n, d = x.shape
    hw = int(math.sqrt(n))
    assert hw * hw == n, "n must be a perfect square"
    W = hw

    # Lane-density guard: pad channels so the fused (w, d) lane axis is a
    # multiple of 128 (unmasked vst, whole-vreg lane rolls).
    if (W * d) % 128 != 0:
        step = 128 // math.gcd(W, 128)
        dp = ((d + step - 1) // step) * step
    else:
        dp = d
    WD = W * dp

    x_p = x if dp == d else jnp.pad(x, ((0, 0), (0, 0), (0, dp - d)))
    w_p = weight_dw if dp == d else jnp.pad(weight_dw, ((0, dp - d), (0, 0), (0, 0)))
    b_p = bias if dp == d else jnp.pad(bias, (0, dp - d))

    # (b, n, dp) -> (b*h, W*dp): channels fused with w on the lane axis.
    x2 = x_p.reshape(b * hw, WD)

    # Per-tap weight vectors over the fused lane axis, flattened to (9, WD)
    # with k = 3*ki + kj.  Column-wrap lanes are pre-zeroed so the in-kernel
    # lane rolls need no masking: kj=0 reads j-1 (invalid at j==0), kj=2 reads
    # j+1 (invalid at j==W-1).
    w_cl = jnp.transpose(w_p, (1, 2, 0)).reshape(9, dp)      # (9, dp)
    w_t = jnp.tile(w_cl, (1, W)).astype(jnp.float32)         # (9, W*dp)
    col = jnp.arange(WD, dtype=jnp.int32) // dp
    left_ok = (col >= 1).astype(jnp.float32)
    right_ok = (col <= W - 2).astype(jnp.float32)
    for k in (0, 3, 6):
        w_t = w_t.at[k].multiply(left_ok)
    for k in (2, 5, 8):
        w_t = w_t.at[k].multiply(right_ok)

    b_t = jnp.tile(b_p.astype(jnp.float32), W).reshape(1, WD)

    # Batch tiling.  Budget ~8 MiB of (input + output) per grid step to
    # amortise per-step overhead, but keep the grid extent >= 2 when b >= 2 so
    # both v7x TensorCores get work (one extra ~0.35us step elsewhere).
    itemsize = x.dtype.itemsize
    blk_img_bytes = 2 * hw * WD * itemsize            # in + out block per image
    budget = 8 << 20
    bt_cap = max(1, budget // max(blk_img_bytes, 1))
    if b >= 2:
        bt_cap = min(bt_cap, b // 2)
    bt_cap = max(1, min(bt_cap, b))

    bt = None
    for cand in range(bt_cap, 0, -1):
        # Need b % bt == 0 and sublane-aligned blocks ((bt*h) % 8 == 0).
        if b % cand == 0 and (cand * hw) % 8 == 0:
            bt = cand
            break
    if bt is None:
        bt = b          # whole-array block (always layout-legal)
    grid = (b // bt,)

    # VMEM request derived from the real footprint: double-buffered in + out
    # blocks, weights/bias (also double-buffered), plus slack.  Capped at
    # 32 MiB so it stays well inside v7x's 64 MiB physical VMEM.
    block_bytes = bt * hw * WD * itemsize
    aux_bytes = (9 + 1) * WD * 4
    vmem_need = 4 * block_bytes + 2 * aux_bytes + (1 << 20)
    vmem_limit = int(min(max(vmem_need, 2 << 20), 32 << 20))

    cost = pl.CostEstimate(
        flops=18 * b * n * dp,                               # 9 taps * (mul + add)
        transcendentals=0,
        bytes_accessed=2 * b * n * dp * itemsize,            # read x + write out
    )

    out2 = pl.pallas_call(
        functools.partial(_peg_kernel, d=dp, h=hw),
        out_shape=jax.ShapeDtypeStruct((b * hw, WD), x.dtype),
        grid_spec=pltpu.PrefetchScalarGridSpec(
            num_scalar_prefetch=0,
            grid=grid,
            in_specs=[
                pl.BlockSpec((bt * hw, WD), lambda i: (i, 0)),
                pl.BlockSpec((9, WD), lambda i: (0, 0)),
                pl.BlockSpec((1, WD), lambda i: (0, 0)),
            ],
            out_specs=pl.BlockSpec((bt * hw, WD), lambda i: (i, 0)),
        ),
        compiler_params=pltpu.CompilerParams(
            dimension_semantics=("parallel",),
            vmem_limit_bytes=vmem_limit,
        ),
        cost_estimate=cost,
    )(x2, w_t, b_t)

    out = out2.reshape(b, n, dp)
    if dp != d:
        out = out[..., :d]
    return out


def peg_reference(x, weight_dw, bias):
    """Pure-JAX reference (mirrors torch depthwise Conv2d, NCHW)."""
    b, n, d = x.shape
    hw = int(math.sqrt(n))
    x_nchw = jnp.transpose(x.reshape(b, hw, hw, d), (0, 3, 1, 2))
    w = weight_dw.reshape(d, 1, 3, 3)  # OIHW with groups=d
    y = lax.conv_general_dilated(
        x_nchw, w, window_strides=(1, 1), padding="SAME",
        feature_group_count=d,
        dimension_numbers=("NCHW", "OIHW", "NCHW"))
    y = y + bias[None, :, None, None]
    return jnp.transpose(y, (0, 2, 3, 1)).reshape(b, n, d)


if __name__ == "__main__":
    key = jax.random.PRNGKey(0)
    k_x, k_w, k_b = jax.random.split(key, 3)

    b, hw, d = 2, 8, 32          # n = 64, patches_width = 32
    n = hw * hw

    x = jax.random.normal(k_x, (b, n, d), dtype=jnp.float32)
    # Conv2d params: weight (d, 1, 3, 3) stored as (d, 3, 3), bias (d,)
    weight_dw = jax.random.normal(k_w, (d, 3, 3), dtype=jnp.float32) * 0.1
    bias = jax.random.normal(k_b, (d,), dtype=jnp.float32) * 0.01

    out = peg_forward(x, weight_dw, bias)
    out = jax.block_until_ready(out)

    ref = peg_reference(x, weight_dw, bias)
    assert out.shape == (b, n, d)
    assert jnp.allclose(out, ref, atol=1e-4, rtol=1e-4), "mismatch vs reference"

    print("KERNEL_OK")
</pallas_src>

<mosaic_0001>
module attributes {stable_mosaic.version = 11 : i64} {
  func.func @_peg_kernel(%arg0: i32, %arg1: memref<8x256xf32, #tpu.memory_space<vmem>>, %arg2: memref<9x256xf32, #tpu.memory_space<vmem>>, %arg3: memref<1x256xf32, #tpu.memory_space<vmem>>, %arg4: memref<8x256xf32, #tpu.memory_space<vmem>>) attributes {dimension_semantics = [#tpu.dimension_semantics<parallel>], iteration_bounds = array<i64: 2>, scalar_prefetch = 0 : i64, scratch_operands = 0 : i64, tpu.core_type = #tpu.core_type<tc>, window_params = [{transform_indices = @transform_0, window_bounds = array<i64: 8, 256>}, {pipeline_mode = #tpu.pipeline_mode<synchronous>, transform_indices = @transform_1, window_bounds = array<i64: 9, 256>}, {pipeline_mode = #tpu.pipeline_mode<synchronous>, transform_indices = @transform_2, window_bounds = array<i64: 1, 256>}, {transform_indices = @transform_3, window_bounds = array<i64: 8, 256>}]} {
    %c0 = arith.constant 0 : index
    %c0_0 = arith.constant 0 : index
    %0 = vector.load %arg1[%c0, %c0_0] : memref<8x256xf32, #tpu.memory_space<vmem>>, vector<8x256xf32>
    %c32_i32 = arith.constant 32 : i32
    %1 = tpu.dynamic_rotate %0 by %c32_i32 dim 1 : vector<8x256xf32>, i32 -> vector<8x256xf32>
    %c224_i32 = arith.constant 224 : i32
    %2 = tpu.dynamic_rotate %0 by %c224_i32 dim 1 : vector<8x256xf32>, i32 -> vector<8x256xf32>
    %c1 = arith.constant 1 : index
    %c0_1 = arith.constant 0 : index
    %3 = vector.load %arg2[%c1, %c0_1] : memref<9x256xf32, #tpu.memory_space<vmem>>, vector<1x256xf32>
    %4 = vector.shape_cast %3 : vector<1x256xf32> to vector<256xf32>
    %5 = vector.shape_cast %4 : vector<256xf32> to vector<1x256xf32>
    %6 = vector.broadcast %5 : vector<1x256xf32> to vector<8x256xf32>
    %7 = arith.mulf %0, %6 : vector<8x256xf32>
    %c0_2 = arith.constant 0 : index
    %c0_3 = arith.constant 0 : index
    %8 = vector.load %arg2[%c0_2, %c0_3] : memref<9x256xf32, #tpu.memory_space<vmem>>, vector<1x256xf32>
    %9 = vector.shape_cast %8 : vector<1x256xf32> to vector<256xf32>
    %10 = vector.shape_cast %9 : vector<256xf32> to vector<1x256xf32>
    %11 = vector.broadcast %10 : vector<1x256xf32> to vector<8x256xf32>
    %12 = arith.mulf %1, %11 : vector<8x256xf32>
    %13 = arith.addf %7, %12 : vector<8x256xf32>
    %c2 = arith.constant 2 : index
    %c0_4 = arith.constant 0 : index
    %14 = vector.load %arg2[%c2, %c0_4] : memref<9x256xf32, #tpu.memory_space<vmem>>, vector<1x256xf32>
    %15 = vector.shape_cast %14 : vector<1x256xf32> to vector<256xf32>
    %16 = vector.shape_cast %15 : vector<256xf32> to vector<1x256xf32>
    %17 = vector.broadcast %16 : vector<1x256xf32> to vector<8x256xf32>
    %18 = arith.mulf %2, %17 : vector<8x256xf32>
    %19 = arith.addf %13, %18 : vector<8x256xf32>
    %c4 = arith.constant 4 : index
    %c0_5 = arith.constant 0 : index
    %20 = vector.load %arg2[%c4, %c0_5] : memref<9x256xf32, #tpu.memory_space<vmem>>, vector<1x256xf32>
    %21 = vector.shape_cast %20 : vector<1x256xf32> to vector<256xf32>
    %22 = vector.shape_cast %21 : vector<256xf32> to vector<1x256xf32>
    %23 = vector.broadcast %22 : vector<1x256xf32> to vector<8x256xf32>
    %24 = arith.mulf %0, %23 : vector<8x256xf32>
    %c3 = arith.constant 3 : index
    %c0_6 = arith.constant 0 : index
    %25 = vector.load %arg2[%c3, %c0_6] : memref<9x256xf32, #tpu.memory_space<vmem>>, vector<1x256xf32>
    %26 = vector.shape_cast %25 : vector<1x256xf32> to vector<256xf32>
    %27 = vector.shape_cast %26 : vector<256xf32> to vector<1x256xf32>
    %28 = vector.broadcast %27 : vector<1x256xf32> to vector<8x256xf32>
    %29 = arith.mulf %1, %28 : vector<8x256xf32>
    %30 = arith.addf %24, %29 : vector<8x256xf32>
    %c5 = arith.constant 5 : index
    %c0_7 = arith.constant 0 : index
    %31 = vector.load %arg2[%c5, %c0_7] : memref<9x256xf32, #tpu.memory_space<vmem>>, vector<1x256xf32>
    %32 = vector.shape_cast %31 : vector<1x256xf32> to vector<256xf32>
    %33 = vector.shape_cast %32 : vector<256xf32> to vector<1x256xf32>
    %34 = vector.broadcast %33 : vector<1x256xf32> to vector<8x256xf32>
    %35 = arith.mulf %2, %34 : vector<8x256xf32>
    %36 = arith.addf %30, %35 : vector<8x256xf32>
    %c0_8 = arith.constant 0 : index
    %c0_9 = arith.constant 0 : index
    %37 = vector.load %arg3[%c0_8, %c0_9] : memref<1x256xf32, #tpu.memory_space<vmem>>, vector<1x256xf32>
    %38 = vector.broadcast %37 : vector<1x256xf32> to vector<8x256xf32>
    %39 = arith.addf %36, %38 : vector<8x256xf32>
    %c7 = arith.constant 7 : index
    %c0_10 = arith.constant 0 : index
    %40 = vector.load %arg2[%c7, %c0_10] : memref<9x256xf32, #tpu.memory_space<vmem>>, vector<1x256xf32>
    %41 = vector.shape_cast %40 : vector<1x256xf32> to vector<256xf32>
    %42 = vector.shape_cast %41 : vector<256xf32> to vector<1x256xf32>
    %43 = vector.broadcast %42 : vector<1x256xf32> to vector<8x256xf32>
    %44 = arith.mulf %0, %43 : vector<8x256xf32>
    %c6 = arith.constant 6 : index
    %c0_11 = arith.constant 0 : index
    %45 = vector.load %arg2[%c6, %c0_11] : memref<9x256xf32, #tpu.memory_space<vmem>>, vector<1x256xf32>
    %46 = vector.shape_cast %45 : vector<1x256xf32> to vector<256xf32>
    %47 = vector.shape_cast %46 : vector<256xf32> to vector<1x256xf32>
    %48 = vector.broadcast %47 : vector<1x256xf32> to vector<8x256xf32>
    %49 = arith.mulf %1, %48 : vector<8x256xf32>
    %50 = arith.addf %44, %49 : vector<8x256xf32>
    %c8 = arith.constant 8 : index
    %c0_12 = arith.constant 0 : index
    %51 = vector.load %arg2[%c8, %c0_12] : memref<9x256xf32, #tpu.memory_space<vmem>>, vector<1x256xf32>
    %52 = vector.shape_cast %51 : vector<1x256xf32> to vector<256xf32>
    %53 = vector.shape_cast %52 : vector<256xf32> to vector<1x256xf32>
    %54 = vector.broadcast %53 : vector<1x256xf32> to vector<8x256xf32>
    %55 = arith.mulf %2, %54 : vector<8x256xf32>
    %56 = arith.addf %50, %55 : vector<8x256xf32>
    %57 = tpu.iota {dimensions = array<i32: 0>} : vector<8x256xi32>
    %c1_i32 = arith.constant 1 : i32
    %58 = vector.broadcast %c1_i32 : i32 to vector<8x256xi32>
    %59 = arith.cmpi sge, %57, %58 : vector<8x256xi32>
    %c6_i32 = arith.constant 6 : i32
    %60 = vector.broadcast %c6_i32 : i32 to vector<8x256xi32>
    %61 = arith.cmpi sle, %57, %60 : vector<8x256xi32>
    %c1_i32_13 = arith.constant 1 : i32
    %62 = tpu.dynamic_rotate %19 by %c1_i32_13 dim 0 : vector<8x256xf32>, i32 -> vector<8x256xf32>
    %cst = arith.constant 0.000000e+00 : f32
    %63 = vector.broadcast %cst : f32 to vector<8x256xf32>
    %64 = arith.select %59, %62, %63 : vector<8x256xi1>, vector<8x256xf32>
    %65 = arith.addf %39, %64 : vector<8x256xf32>
    %c7_i32 = arith.constant 7 : i32
    %66 = tpu.dynamic_rotate %56 by %c7_i32 dim 0 : vector<8x256xf32>, i32 -> vector<8x256xf32>
    %cst_14 = arith.constant 0.000000e+00 : f32
    %67 = vector.broadcast %cst_14 : f32 to vector<8x256xf32>
    %68 = arith.select %61, %66, %67 : vector<8x256xi1>, vector<8x256xf32>
    %69 = arith.addf %65, %68 : vector<8x256xf32>
    %c0_15 = arith.constant 0 : index
    %c0_16 = arith.constant 0 : index
    %70 = vector.load %arg4[%c0_15, %c0_16] : memref<8x256xf32, #tpu.memory_space<vmem>>, vector<8x256xf32>
    tpu.vector_store %arg4[%c0_15, %c0_16], %69 {strides = array<i32>} : memref<8x256xf32, #tpu.memory_space<vmem>>, vector<8x256xf32>,
    return
  }
  func.func @transform_0(%arg0: i32) -> (i32, i32) {
    %c0_i32 = arith.constant 0 : i32
    %c0_i32_0 = arith.constant 0 : i32
    return %arg0, %c0_i32 : i32, i32
  }
  func.func @transform_1(%arg0: i32) -> (i32, i32) {
    %c0_i32 = arith.constant 0 : i32
    %c0_i32_0 = arith.constant 0 : i32
    %c0_i32_1 = arith.constant 0 : i32
    return %c0_i32, %c0_i32_0 : i32, i32
  }
  func.func @transform_2(%arg0: i32) -> (i32, i32) {
    %c0_i32 = arith.constant 0 : i32
    %c0_i32_0 = arith.constant 0 : i32
    %c0_i32_1 = arith.constant 0 : i32
    return %c0_i32, %c0_i32_0 : i32, i32
  }
  func.func @transform_3(%arg0: i32) -> (i32, i32) {
    %c0_i32 = arith.constant 0 : i32
    %c0_i32_0 = arith.constant 0 : i32
    return %arg0, %c0_i32 : i32, i32
  }
}

</mosaic_0001>

<llo_original>
// kernel: tpu_custom_call.1
$region0: #{tpu_custom_call.1}
  #allocation0 [shape = 'u32[]', space=smem, size = 0x4, offset = 0x4, fixed_abs, tag = 'smem constant byte address 0x4 - core index']
  #allocation1 [shape = 'u32[144,128]{1,0:T(1,128)}', space=vmem, size = 0x12000, scoped, tag = 'internal scratch']
  %s0 = inlined_call_operand.hbm [shape: f32[16,256], index: 0, kind: input, shape index: {}]
  %s1 = inlined_call_operand.hbm [shape: f32[9,256], index: 1, kind: input, shape index: {}]
  %s2 = inlined_call_operand.vmem [shape: f32[1,256], index: 2, kind: input, shape index: {}]
  %s3 = inlined_call_operand.hbm [shape: f32[16,256], index: 3, kind: output, shape index: {}]
  %s4 = sld [smem:[#allocation0]]
  $region53: #{tpu_custom_call.1} parent=0
    _
  %s6 = ssub.s32 1, %s4
  %s7 = scalar_select 0, %s6, %s4
  $region1: #{tpu_custom_call.1} parent=0
    #allocation2 [shape = 'u8[16384]{0}', space=vmem, size = 0x4000, scoped, tag = 'input window, operand 0']
    #allocation3 [shape = 's32[2]{0}', space=sflag, size = 0x8, scoped, tag = 'scoped memory for tpu_custom_call.1']
    #allocation4 [shape = 's32[2]{0}', space=sflag, size = 0x8, scoped, tag = 'scoped memory for tpu_custom_call.1']
    #allocation5 [shape = 'u8[16384]{0}', space=vmem, size = 0x4000, scoped, tag = 'input window, operand 1, single buffered']
    #allocation6 [shape = 's32[1]{0}', space=sflag, size = 0x4, scoped, tag = 'scoped memory for tpu_custom_call.1']
    #allocation7 [shape = 'u8[16384]{0}', space=vmem, size = 0x4000, scoped, tag = 'output window, operand 0']
    %8 = vsyncpa [#allocation3], 0
    %s9 = scalar_lea.sflag [#allocation3], 1
    %10 = vsyncpa %s9, 0
    %11 = vsyncpa [#allocation6], 0
    %12 = vsyncpa [#allocation4], 0
    %s13 = scalar_lea.sflag [#allocation4], 1
    %14 = vsyncpa %s13, 0
    loop: start=0, step=1, limit=4
    $region2: #{tpu_custom_call.1} parent=1 // loop_pre_header
      _
    $region3: #{tpu_custom_call.1} parent=1 // loop_header
      %s16 = sphi 0, %s20
      %p17 = scmp.ge.s32.totalorder %s16, 4
      %s26 = sphi 0, %s28
      %s29 = sphi 0, %s26
      %s30 = sphi 0, %s29
      %s46 = sphi 0, %s30
      %s50 = sphi 0, %s50
      %s52 = sphi 0, %s50
      %s53 = sphi 0, %s52
      %s67 = sphi 0, %s53
      %s71 = sphi 0, %s71
      %s73 = sphi 0, %s71
      %s74 = sphi 0, %s73
      %s88 = sphi 0, %s74
      %s94 = sphi 0, %s96
      %s97 = sphi 0, %s94
      %s98 = sphi 0, %s97
      %s114 = sphi 0, %s98
    $region4: #{tpu_custom_call.1} parent=1 // loop_header_branch
      %19 = sbr.rel (%p17) target = $region8
    $region5: #{tpu_custom_call.1} parent=1 // loop_body
      %s21 = ssub.s32 %s16, 1
      %s22 = ssub.s32 %s16, 2
      %s23 = sadd.s32 %s16, 1
      %s24 = ssub.s32 %s16, %s23
      %p25 = scmp.eq.s32.totalorder %s24, 0
      %s27 = sadd.s32 %s26, 1
      %s28 = scalar_select %p25, %s26, %s27
      %p31 = pneg %p25
      %p32 = scmp.eq.s32.totalorder %s16, 1
      %p33 = por %p31, %p32
      %p34 = scmp.ne.s32.totalorder %s26, %s29
      %p35 = scmp.eq.s32.totalorder %s16, 0
      %p36 = por %p34, %p35
      %p37 = scmp.ne.s32.totalorder %s26, %s29
      %p38 = scmp.eq.s32.totalorder %s21, 1
      %p39 = por %p37, %p38
      %p40 = scmp.ne.s32.totalorder %s29, %s30
      %p41 = scmp.eq.s32.totalorder %s21, 0
      %p42 = por %p40, %p41
      %p43 = scmp.ne.s32.totalorder %s29, %s30
      %p44 = scmp.eq.s32.totalorder %s22, 1
      %p45 = por %p43, %p44
      %p47 = scmp.ne.s32.totalorder %s30, %s46
      %p48 = scmp.eq.s32.totalorder %s22, 0
      %p49 = por %p47, %p48
      %s51 = sadd.s32 %s50, 1
      %p54 = scmp.eq.s32.totalorder %s16, 1
      %p55 = scmp.ne.s32.totalorder %s50, %s52
      %p56 = scmp.eq.s32.totalorder %s16, 0
      %p57 = por %p55, %p56
      %p58 = scmp.ne.s32.totalorder %s50, %s52
      %p59 = scmp.eq.s32.totalorder %s21, 1
      %p60 = por %p58, %p59
      %p61 = scmp.ne.s32.totalorder %s52, %s53
      %p62 = scmp.eq.s32.totalorder %s21, 0
      %p63 = por %p61, %p62
      %p64 = scmp.ne.s32.totalorder %s52, %s53
      %p65 = scmp.eq.s32.totalorder %s22, 1
      %p66 = por %p64, %p65
      %p68 = scmp.ne.s32.totalorder %s53, %s67
      %p69 = scmp.eq.s32.totalorder %s22, 0
      %p70 = por %p68, %p69
      %s72 = sadd.s32 %s71, 1
      %p75 = scmp.eq.s32.totalorder %s16, 1
      %p76 = scmp.ne.s32.totalorder %s71, %s73
      %p77 = scmp.eq.s32.totalorder %s16, 0
      %p78 = por %p76, %p77
      %p79 = scmp.ne.s32.totalorder %s71, %s73
      %p80 = scmp.eq.s32.totalorder %s21, 1
      %p81 = por %p79, %p80
      %p82 = scmp.ne.s32.totalorder %s73, %s74
      %p83 = scmp.eq.s32.totalorder %s21, 0
      %p84 = por %p82, %p83
      %p85 = scmp.ne.s32.totalorder %s73, %s74
      %p86 = scmp.eq.s32.totalorder %s22, 1
      %p87 = por %p85, %p86
      %p89 = scmp.ne.s32.totalorder %s74, %s88
      %p90 = scmp.eq.s32.totalorder %s22, 0
      %p91 = por %p89, %p90
      %s92 = ssub.s32 %s16, %s23
      %p93 = scmp.eq.s32.totalorder %s92, 0
      %s95 = sadd.s32 %s94, 1
      %s96 = scalar_select %p93, %s94, %s95
      %p99 = pneg %p93
      %p100 = scmp.eq.s32.totalorder %s16, 1
      %p101 = por %p99, %p100
      %p102 = scmp.ne.s32.totalorder %s94, %s97
      %p103 = scmp.eq.s32.totalorder %s16, 0
      %p104 = por %p102, %p103
      %p105 = scmp.ne.s32.totalorder %s94, %s97
      %p106 = scmp.eq.s32.totalorder %s21, 1
      %p107 = por %p105, %p106
      %p108 = scmp.ne.s32.totalorder %s97, %s98
      %p109 = scmp.eq.s32.totalorder %s21, 0
      %p110 = por %p108, %p109
      %p111 = scmp.ne.s32.totalorder %s97, %s98
      %p112 = scmp.eq.s32.totalorder %s22, 1
      %p113 = por %p111, %p112
      %p115 = scmp.ne.s32.totalorder %s98, %s114
      %p116 = scmp.eq.s32.totalorder %s22, 0
      %p117 = por %p115, %p116
      %p118 = scmp.le.s32.totalorder 1, %s16
      %p119 = scmp.lt.s32.totalorder %s16, 3
      %p120 = pnand %p118, %p119
      %p121 = pneg %p120
      // Predicated region
      $region9: #{tpu_custom_call.1} parent=5 // pred_check
        _
      $region10: #{tpu_custom_call.1} parent=5 // pred_check_branch
        %123 = sbr.rel (%p120) target = $region12
      $region11: #{tpu_custom_call.1} parent=5 // pred_region
        %s124 = ssub.s32 %s16, 1
        // Predicated region
        $region13: #{tpu_custom_call.1} parent=11 // pred_check
          %p125 = pneg %p63
        $region14: #{tpu_custom_call.1} parent=11 // pred_check_branch
          %127 = sbr.rel (%p125) target = $region16
        $region15: #{tpu_custom_call.1} parent=11 // pred_region
          %s129 = ssub.s32 512, 512
          %130 = vsyncadd [#allocation6], %s129
          %s131 = sshll.u32 [#allocation5], 4
          %s132 = int_to_ptr.vmem [resolvable:$true] %s131
          %137 = dma.hbm_to_vmem [thread:$0]  %s1, 512, %s132, [#allocation6], 256, 256, 16
        $region16: #{tpu_custom_call.1} parent=11 // pred_fallthru
          _
        // Predicated region
        $region17: #{tpu_custom_call.1} parent=11 // pred_check
          %p138 = pneg %p84
        $region18: #{tpu_custom_call.1} parent=11 // pred_check_branch
          %140 = sbr.rel (%p138) target = $region20
        $region19: #{tpu_custom_call.1} parent=11 // pred_region
          _
        $region20: #{tpu_custom_call.1} parent=11 // pred_fallthru
          _
      $region12: #{tpu_custom_call.1} parent=5 // pred_fallthru
        _
      %p141 = scmp.lt.s32.totalorder %s16, 2
      // Predicated region
      $region21: #{tpu_custom_call.1} parent=5 // pred_check
        %p142 = pneg %p141
      $region22: #{tpu_custom_call.1} parent=5 // pred_check_branch
        %144 = sbr.rel (%p142) target = $region24
      $region23: #{tpu_custom_call.1} parent=5 // pred_region
        // Predicated region
        $region25: #{tpu_custom_call.1} parent=23 // pred_check
          %p145 = pneg %p36
        $region26: #{tpu_custom_call.1} parent=23 // pred_check_branch
          %147 = sbr.rel (%p145) target = $region28
        $region27: #{tpu_custom_call.1} parent=23 // pred_region
          %s148 = sand.u32 %s26, 1
          %s149 = scalar_lea.sflag [#allocation3], %s148
          %s150 = sand.u32 %s26, 1
          %s151 = smul.addr %s150, 16
          %s152 = scalar_lea.vmem [#allocation2], %s151
          %s154 = ssub.s32 256, 256
          %155 = vsyncadd %s149, %s154
          %s156 = smul.addr %s16, 2
          %s157 = smul.addr %s156, 128
          %s158 = scalar_lea.hbm %s0, %s157
          %s160 = sshll.u32 %s152, 4
          %s161 = int_to_ptr.vmem [resolvable:$true] %s160
          %163 = dma.hbm_to_vmem [thread:$0]  %s158, 256, %s161, %s149
        $region28: #{tpu_custom_call.1} parent=23 // pred_fallthru
          _
      $region24: #{tpu_custom_call.1} parent=5 // pred_fallthru
        _
      %p164 = scmp.le.s32.totalorder 1, %s16
      %p165 = scmp.lt.s32.totalorder %s16, 3
      %p166 = pnand %p164, %p165
      %p167 = pneg %p166
      // Predicated region
      $region29: #{tpu_custom_call.1} parent=5 // pred_check
        _
      $region30: #{tpu_custom_call.1} parent=5 // pred_check_branch
        %169 = sbr.rel (%p166) target = $region32
      $region31: #{tpu_custom_call.1} parent=5 // pred_region
        %s170 = ssub.s32 %s16, 1
        %s171 = sand.u32 %s29, 1
        %s172 = scalar_lea.sflag [#allocation3], %s171
        %s173 = sand.u32 %s29, 1
        %s174 = smul.addr %s173, 16
        %s175 = scalar_lea.vmem [#allocation2], %s174
        // Predicated region
        $region33: #{tpu_custom_call.1} parent=31 // pred_check
          %p176 = pneg %p42
        $region34: #{tpu_custom_call.1} parent=31 // pred_check_branch
          %178 = sbr.rel (%p176) target = $region36
        $region35: #{tpu_custom_call.1} parent=31 // pred_region
          %179 = dma.done %s172, 256
        $region36: #{tpu_custom_call.1} parent=31 // pred_fallthru
          _
        // Predicated region
        $region37: #{tpu_custom_call.1} parent=31 // pred_check
          %p180 = pneg %p63
        $region38: #{tpu_custom_call.1} parent=31 // pred_check_branch
          %182 = sbr.rel (%p180) target = $region40
        $region39: #{tpu_custom_call.1} parent=31 // pred_region
          %183 = dma.done [#allocation6], 512
        $region40: #{tpu_custom_call.1} parent=31 // pred_fallthru
          _
        %s184 = sand.u32 %s29, 1
        %s185 = scalar_lea.sflag [#allocation3], %s184
        %s186 = sand.u32 %s29, 1
        %s187 = smul.addr %s186, 16
        %s188 = scalar_lea.vmem [#allocation2], %s187
        %p189 = pneg %p42
        %p190 = pneg %p39
        %p191 = pneg %p63
        %p192 = pneg %p60
        %p193 = pneg %p84
        %p194 = pneg %p81
        %p195 = pneg %p110
        %p196 = pneg %p107
        %s197 = sand.u32 %s97, 1
        %s198 = scalar_lea.sflag [#allocation4], %s197
        %s199 = sand.u32 %s97, 1
        %s200 = smul.addr %s199, 16
        %s201 = scalar_lea.vmem [#allocation7], %s200
        %v202 = vld [vmem:[%s175] sm:$0xff]
        %v203 = vld [vmem:[%s175 + $0x8] sm:$0xff]
        %204 = vrot.lane.b32.xlu0 %v202, 32
        %v205 = vpop.permute.xlu0 %204
        %206 = vrot.lane.b32.xlu0 %v203, 32
        %v207 = vpop.permute.xlu0 %206
        %v208 = vlaneseq
        %v209 = vand.u32 %v208, 127
        %vm210 = vcmp.lt.s32.totalorder %v209, 32
        %v211 = vsel %vm210, %v205, %v207
        %v212 = vsel %vm210, %v207, %v205
        %213 = vrot.lane.b32.xlu0 %v202, 96
        %v214 = vpop.permute.xlu0 %213
        %215 = vrot.lane.b32.xlu0 %v203, 96
        %v216 = vpop.permute.xlu0 %215
        %vm217 = vcmp.lt.s32.totalorder %v209, 96
        %v218 = vsel %vm217, %v214, %v216
        %v219 = vsel %vm217, %v216, %v214
        %s220 = scalar_lea.vmem [#allocation5], 1
        %v221 = vld [vmem:[%s220] ss:$8 sm:$0x3]
        %v223 = vlaneseq
        %v224 = vshrl.u32 %v223, 7
        %v225 = vsub.s32 0, %v224
        %v226 = vrot.slane %v221, %v225
        %v227 = vlaneseq
        %v228 = vshrl.u32 %v227, 7
        %v229 = vsub.s32 1, %v228
        %v230 = vrot.slane %v221, %v229
        %v233 = vmul.f32 %v202, %v226
        %v234 = vmul.f32 %v203, %v230
        %v235 = vld [vmem:[#allocation5] ss:$8 sm:$0x3]
        %v237 = vlaneseq
        %v238 = vshrl.u32 %v237, 7
        %v239 = vsub.s32 0, %v238
        %v240 = vrot.slane %v235, %v239
        %v241 = vlaneseq
        %v242 = vshrl.u32 %v241, 7
        %v243 = vsub.s32 1, %v242
        %v244 = vrot.slane %v235, %v243
        %v247 = vmul.f32 %v212, %v240
        %v248 = vmul.f32 %v211, %v244
        %v249 = vadd.f32 %v233, %v247
        %v250 = vadd.f32 %v234, %v248
        %s251 = scalar_lea.vmem [#allocation5], 2
        %v252 = vld [vmem:[%s251] ss:$8 sm:$0x3]
        %v254 = vlaneseq
        %v255 = vshrl.u32 %v254, 7
        %v256 = vsub.s32 0, %v255
        %v257 = vrot.slane %v252, %v256
        %v258 = vlaneseq
        %v259 = vshrl.u32 %v258, 7
        %v260 = vsub.s32 1, %v259
        %v261 = vrot.slane %v252, %v260
        %v264 = vmul.f32 %v218, %v257
        %v265 = vmul.f32 %v219, %v261
        %v266 = vadd.f32 %v249, %v264
        %v267 = vadd.f32 %v250, %v265
        %s268 = scalar_lea.vmem [#allocation5], 4
        %v269 = vld [vmem:[%s268] ss:$8 sm:$0x3]
        %v271 = vlaneseq
        %v272 = vshrl.u32 %v271, 7
        %v273 = vsub.s32 0, %v272
        %v274 = vrot.slane %v269, %v273
        %v275 = vlaneseq
        %v276 = vshrl.u32 %v275, 7
        %v277 = vsub.s32 1, %v276
        %v278 = vrot.slane %v269, %v277
        %v281 = vmul.f32 %v202, %v274
        %v282 = vmul.f32 %v203, %v278
        %s283 = scalar_lea.vmem [#allocation5], 3
        %v284 = vld [vmem:[%s283] ss:$8 sm:$0x3]
        %v286 = vlaneseq
        %v287 = vshrl.u32 %v286, 7
        %v288 = vsub.s32 0, %v287
        %v289 = vrot.slane %v284, %v288
        %v290 = vlaneseq
        %v291 = vshrl.u32 %v290, 7
        %v292 = vsub.s32 1, %v291
        %v293 = vrot.slane %v284, %v292
        %v296 = vmul.f32 %v212, %v289
        %v297 = vmul.f32 %v211, %v293
        %v298 = vadd.f32 %v281, %v296
        %v299 = vadd.f32 %v282, %v297
        %s300 = scalar_lea.vmem [#allocation5], 5
        %v301 = vld [vmem:[%s300] ss:$8 sm:$0x3]
        %v303 = vlaneseq
        %v304 = vshrl.u32 %v303, 7
        %v305 = vsub.s32 0, %v304
        %v306 = vrot.slane %v301, %v305
        %v307 = vlaneseq
        %v308 = vshrl.u32 %v307, 7
        %v309 = vsub.s32 1, %v308
        %v310 = vrot.slane %v301, %v309
        %v313 = vmul.f32 %v218, %v306
        %v314 = vmul.f32 %v219, %v310
        %v315 = vadd.f32 %v298, %v313
        %v316 = vadd.f32 %v299, %v314
        %v317 = vld [vmem:[%s2] sm:$0x3]
        %v319 = vlaneseq
        %v320 = vshrl.u32 %v319, 7
        %v321 = vsub.s32 0, %v320
        %v322 = vrot.slane %v317, %v321
        %v323 = vlaneseq
        %v324 = vshrl.u32 %v323, 7
        %v325 = vsub.s32 1, %v324
        %v326 = vrot.slane %v317, %v325
        %v329 = vadd.f32 %v315, %v322
        %v330 = vadd.f32 %v316, %v326
        %s331 = scalar_lea.vmem [#allocation5], 7
        %v332 = vld [vmem:[%s331] ss:$8 sm:$0x3]
        %v334 = vlaneseq
        %v335 = vshrl.u32 %v334, 7
        %v336 = vsub.s32 0, %v335
        %v337 = vrot.slane %v332, %v336
        %v338 = vlaneseq
        %v339 = vshrl.u32 %v338, 7
        %v340 = vsub.s32 1, %v339
        %v341 = vrot.slane %v332, %v340
        %v344 = vmul.f32 %v202, %v337
        %v345 = vmul.f32 %v203, %v341
        %s346 = scalar_lea.vmem [#allocation5], 6
        %v347 = vld [vmem:[%s346] ss:$8 sm:$0x3]
        %v349 = vlaneseq
        %v350 = vshrl.u32 %v349, 7
        %v351 = vsub.s32 0, %v350
        %v352 = vrot.slane %v347, %v351
        %v353 = vlaneseq
        %v354 = vshrl.u32 %v353, 7
        %v355 = vsub.s32 1, %v354
        %v356 = vrot.slane %v347, %v355
        %v359 = vmul.f32 %v212, %v352
        %v360 = vmul.f32 %v211, %v356
        %v361 = vadd.f32 %v344, %v359
        %v362 = vadd.f32 %v345, %v360
        %s363 = scalar_lea.vmem [#allocation5], 16
        %v364 = vld [vmem:[%s363] ss:$8 sm:$0x3]
        %v366 = vlaneseq
        %v367 = vshrl.u32 %v366, 7
        %v368 = vsub.s32 0, %v367
        %v369 = vrot.slane %v364, %v368
        %v370 = vlaneseq
        %v371 = vshrl.u32 %v370, 7
        %v372 = vsub.s32 1, %v371
        %v373 = vrot.slane %v364, %v372
        %v376 = vmul.f32 %v218, %v369
        %v377 = vmul.f32 %v219, %v373
        %v378 = vadd.f32 %v361, %v376
        %v379 = vadd.f32 %v362, %v377
        %v380 = vlaneseq
        %v381 = vshrl.u32 %v380, 7
        %vm382 = vcmp.ge.s32.totalorder %v381, 1
        %vm383 = vcmp.le.s32.totalorder %v381, 6
        %v384 = vrot.slane %v266, 7
        %v385 = vrot.slane %v267, 7
        %v386 = vsel %vm382, %v384, 0.0
        %v387 = vsel %vm382, %v385, 0.0
        %v388 = vadd.f32 %v329, %v386
        %v389 = vadd.f32 %v330, %v387
        %v390 = vrot.slane %v378, 1
        %v391 = vrot.slane %v379, 1
        %v392 = vsel %vm383, %v390, 0.0
        %v393 = vsel %vm383, %v391, 0.0
        %v394 = vadd.f32 %v388, %v392
        %v395 = vadd.f32 %v389, %v393
        %396 = vst [vmem:[%s201] sm:$0xff] %v394
        %397 = vst [vmem:[%s201 + $0x8] sm:$0xff] %v395
        %s398 = sand.u32 %s97, 1
        %s399 = scalar_lea.sflag [#allocation4], %s398
        %s400 = sand.u32 %s97, 1
        %s401 = smul.addr %s400, 16
        %s402 = scalar_lea.vmem [#allocation7], %s401
        // Predicated region
        $region41: #{tpu_custom_call.1} parent=31 // pred_check
          %p403 = pneg %p107
        $region42: #{tpu_custom_call.1} parent=31 // pred_check_branch
          %405 = sbr.rel (%p403) target = $region44
        $region43: #{tpu_custom_call.1} parent=31 // pred_region
          %s407 = ssub.s32 256, 256
          %408 = vsyncadd %s399, %s407
          %s409 = smul.addr %s21, 2
          %s410 = smul.addr %s409, 128
          %s411 = scalar_lea.hbm %s3, %s410
          %s413 = sshll.u32 %s402, 4
          %s414 = int_to_ptr.vmem [resolvable:$true] %s413
          %416 = dma.vmem_to_hbm [thread:$0]  %s414, 256, %s411, %s399
        $region44: #{tpu_custom_call.1} parent=31 // pred_fallthru
          _
      $region32: #{tpu_custom_call.1} parent=5 // pred_fallthru
        _
      %p417 = scmp.le.s32.totalorder 2, %s16
      // Predicated region
      $region45: #{tpu_custom_call.1} parent=5 // pred_check
        %p418 = pneg %p417
      $region46: #{tpu_custom_call.1} parent=5 // pred_check_branch
        %420 = sbr.rel (%p418) target = $region48
      $region47: #{tpu_custom_call.1} parent=5 // pred_region
        %s421 = ssub.s32 %s16, 2
        // Predicated region
        $region49: #{tpu_custom_call.1} parent=47 // pred_check
          %p422 = pneg %p113
        $region50: #{tpu_custom_call.1} parent=47 // pred_check_branch
          %424 = sbr.rel (%p422) target = $region52
        $region51: #{tpu_custom_call.1} parent=47 // pred_region
          %s425 = sand.u32 %s98, 1
          %s426 = scalar_lea.sflag [#allocation4], %s425
          %s427 = sand.u32 %s98, 1
          %s428 = smul.addr %s427, 16
          %s429 = scalar_lea.vmem [#allocation7], %s428
          %430 = dma.done %s426, 256
        $region52: #{tpu_custom_call.1} parent=47 // pred_fallthru
          _
      $region48: #{tpu_custom_call.1} parent=5 // pred_fallthru
        _
    $region6: #{tpu_custom_call.1} parent=1 // loop_footer
      %s20 = sadd.s32 1, %s16
    $region7: #{tpu_custom_call.1} parent=1 // loop_footer_branch
      %15 = sbr.rel target = $region3
    $region8: #{tpu_custom_call.1} parent=1 // loop_exit
      _
    %431 = vsyncpa [#allocation3], 1
    %s432 = scalar_lea.sflag [#allocation3], 1
    %433 = vsyncpa %s432, 1
    %434 = vsyncpa [#allocation6], 1
    %435 = vsyncpa [#allocation4], 1
    %s436 = scalar_lea.sflag [#allocation4], 1
    %437 = vsyncpa %s436, 1

</llo_original>
